<compile_context>
chip_gen: v7x
topology: tpu7x:2x2x1
jax: 0.10.0
libtpu: 0.0.40
codegen_flags: <defaults>
</compile_context>

<pallas_src>
import math
from functools import partial

import jax
import jax.numpy as jnp
from jax.experimental import pallas as pl
from jax.experimental.pallas import tpu as pltpu

_NEG_INF = -1e30  # finite "minus infinity": avoids inf-inf NaNs for masked rows


# ----------------------------------------------------------------------------
# Tiled linear projection kernel:  y = x @ W^T   (W stored like nn.Linear.weight)
# ----------------------------------------------------------------------------
def _linear_kernel(x_ref, w_ref, o_ref, acc_ref):
    @pl.when(pl.program_id(2) == 0)
    def _():
        acc_ref[...] = jnp.zeros_like(acc_ref)

    # x tile (tm, tk) contracted with weight tile (tn, tk) on K ("NT" matmul).
    # Operands are fed to the MXU in their native dtype; accumulation is f32.
    acc_ref[...] += jax.lax.dot_general(
        x_ref[...], w_ref[...],
        dimension_numbers=(((1,), (1,)), ((), ())),
        preferred_element_type=jnp.float32,
    )

    @pl.when(pl.program_id(2) == pl.num_programs(2) - 1)
    def _():
        o_ref[...] = acc_ref[...].astype(o_ref.dtype)


def linear(x2d, weight, *, tm=256, tn=256, tk=512):
    """x2d: (M, K); weight: (O, K) like nn.Linear.weight (bias=False) -> (M, O)."""
    M, K = x2d.shape
    O, K2 = weight.shape
    assert K == K2
    tm, tn, tk = min(tm, M), min(tn, O), min(tk, K)
    if K % tk != 0:  # partial K tiles would pollute the accumulator
        tk = math.gcd(K, tk)
    grid = (pl.cdiv(M, tm), pl.cdiv(O, tn), K // tk)
    return pl.pallas_call(
        _linear_kernel,
        out_shape=jax.ShapeDtypeStruct((M, O), x2d.dtype),
        grid=grid,
        in_specs=[
            pl.BlockSpec((tm, tk), lambda i, j, k: (i, k)),
            pl.BlockSpec((tn, tk), lambda i, j, k: (j, k)),
        ],
        out_specs=pl.BlockSpec((tm, tn), lambda i, j, k: (i, j)),
        scratch_shapes=[pltpu.VMEM((tm, tn), jnp.float32)],
        compiler_params=pltpu.CompilerParams(
            dimension_semantics=("parallel", "parallel", "arbitrary")),
    )(x2d, weight)


# ----------------------------------------------------------------------------
# Flash-attention kernel (GQA), grid = (B, q-tiles, kv-tiles).
# q/k/v refs are windows into the SAME fused qkv activation (B, L, D + 2*kv_dim):
#   q block: (1, blk_q, D)       at last-dim block index 0
#   k block: (1, blk_kv, kv_dim) at last-dim block index `group`
#   v block: (1, blk_kv, kv_dim) at last-dim block index `group + 1`
# Output is written lane-dense as (B, L, D).
# ----------------------------------------------------------------------------
def _flash_attn_kernel(q_ref, k_ref, v_ref, o_ref, m_ref, l_ref, acc_ref, *,
                       num_heads_q, group, head_dim, scale, causal,
                       blk_q, blk_kv):
    qi = pl.program_id(1)
    ki = pl.program_id(2)
    nk = pl.num_programs(2)
    hd = head_dim

    @pl.when(ki == 0)
    def _init():
        m_ref[...] = jnp.full(m_ref.shape, _NEG_INF, dtype=jnp.float32)
        l_ref[...] = jnp.zeros(l_ref.shape, dtype=jnp.float32)
        acc_ref[...] = jnp.zeros(acc_ref.shape, dtype=jnp.float32)

    def _accumulate():
        if causal:
            q_start = qi * blk_q
            k_start = ki * blk_kv
            rows = q_start + jax.lax.broadcasted_iota(jnp.int32, (blk_q, blk_kv), 0)
            cols = k_start + jax.lax.broadcasted_iota(jnp.int32, (blk_q, blk_kv), 1)
            mask = cols <= rows  # shared by all heads of this tile

        # All query heads of every kv group are processed while the k/v tile is
        # resident in VMEM (k/v HBM traffic amortized over `group` q heads).
        for h in range(num_heads_q):
            hk = h // group
            # scale folded into q: O(blk_q * hd) instead of O(blk_q * blk_kv)
            qh = q_ref[0, :, h * hd:(h + 1) * hd] * scale        # (blk_q, hd)
            kh = k_ref[0, :, hk * hd:(hk + 1) * hd]              # (blk_kv, hd)
            vh = v_ref[0, :, hk * hd:(hk + 1) * hd]              # (blk_kv, hd)

            # q @ k^T in native dtype, f32 result on the MXU.
            s = jax.lax.dot_general(
                qh, kh, dimension_numbers=(((1,), (1,)), ((), ())),
                preferred_element_type=jnp.float32)              # (blk_q, blk_kv)
            if causal:
                s = jnp.where(mask, s, _NEG_INF)

            m_prev = m_ref[h]                                    # (blk_q, 1)
            m_new = jnp.maximum(m_prev, jnp.max(s, axis=-1, keepdims=True))
            alpha = jnp.exp(m_prev - m_new)
            p = jnp.exp(s - m_new)                               # f32
            l_ref[h] = alpha * l_ref[h] + jnp.sum(p, axis=-1, keepdims=True)
            m_ref[h] = m_new
            acc_ref[h] = alpha * acc_ref[h] + jnp.dot(
                p.astype(vh.dtype), vh, preferred_element_type=jnp.float32)

    if causal:
        # Skip kv tiles that are entirely above the diagonal for this q tile.
        @pl.when(ki * blk_kv < (qi + 1) * blk_q)
        def _():
            _accumulate()
    else:
        _accumulate()

    @pl.when(ki == nk - 1)
    def _finalize():
        for h in range(num_heads_q):
            inv = pl.reciprocal(l_ref[h], approx=True)           # EUP, (blk_q, 1)
            o_ref[0, :, h * hd:(h + 1) * hd] = (
                acc_ref[h] * inv).astype(o_ref.dtype)


# ----------------------------------------------------------------------------
# Full MHA forward (attn_mask=None, dropout=0.0, use_rope=False: module defaults)
# ----------------------------------------------------------------------------
def mha_forward(x, w_qkv, w_o, *, num_heads_q, num_heads_kv, is_causal,
                blk_q=128, blk_kv=256):
    B, L, D = x.shape
    assert D % num_heads_q == 0
    assert num_heads_q % num_heads_kv == 0
    head_dim = D // num_heads_q
    kv_dim = head_dim * num_heads_kv
    group = num_heads_q // num_heads_kv
    d_total = D + 2 * kv_dim
    scale = 1.0 / math.sqrt(head_dim)  # SDPA default scale = 1/sqrt(dim(k))

    # Fused qkv projection (tiled Pallas matmul).
    qkv = linear(x.reshape(B * L, D), w_qkv).reshape(B, L, d_total)

    # Lane-alignment requirements for reading q/k/v straight from the fused
    # qkv buffer (last-dim blocks that are not the full axis must be 128-aligned).
    assert D % 128 == 0 and kv_dim % 128 == 0, "head slabs must be lane-aligned"
    blk_q = min(blk_q, L)
    blk_kv = min(blk_kv, L)
    assert L % blk_q == 0 and L % blk_kv == 0, "seq len must divide the tiles"
    nq = L // blk_q
    nk = L // blk_kv

    def q_map(b, qi, ki):          # also used for the (B, L, D) output
        return (b, qi, 0)

    def k_map(b, qi, ki):
        if is_causal:              # clamp -> no DMA for fully-masked kv tiles
            ki = jnp.minimum(ki, ((qi + 1) * blk_q - 1) // blk_kv)
        return (b, ki, group)      # k region starts at column D = group * kv_dim

    def v_map(b, qi, ki):
        if is_causal:
            ki = jnp.minimum(ki, ((qi + 1) * blk_q - 1) // blk_kv)
        return (b, ki, group + 1)  # v region starts at column D + kv_dim

    kernel = partial(
        _flash_attn_kernel,
        num_heads_q=num_heads_q, group=group, head_dim=head_dim,
        scale=scale, causal=is_causal, blk_q=blk_q, blk_kv=blk_kv)

    y = pl.pallas_call(
        kernel,
        out_shape=jax.ShapeDtypeStruct((B, L, D), x.dtype),
        grid=(B, nq, nk),
        in_specs=[
            pl.BlockSpec((1, blk_q, D), q_map),
            pl.BlockSpec((1, blk_kv, kv_dim), k_map),
            pl.BlockSpec((1, blk_kv, kv_dim), v_map),
        ],
        out_specs=pl.BlockSpec((1, blk_q, D), q_map),
        scratch_shapes=[
            pltpu.VMEM((num_heads_q, blk_q, 1), jnp.float32),         # m
            pltpu.VMEM((num_heads_q, blk_q, 1), jnp.float32),         # l
            pltpu.VMEM((num_heads_q, blk_q, head_dim), jnp.float32),  # acc
        ],
        compiler_params=pltpu.CompilerParams(
            dimension_semantics=("parallel", "parallel", "arbitrary")),
    )(qkv, qkv, qkv)

    # Output projection (tiled Pallas matmul); y is already (B, L, D) lane-dense.
    return linear(y.reshape(B * L, D), w_o).reshape(B, L, D)


# ----------------------------------------------------------------------------
# Pure-JAX reference (mirrors the PyTorch module) for a correctness check.
# ----------------------------------------------------------------------------
def mha_reference(x, w_qkv, w_o, *, num_heads_q, num_heads_kv, is_causal):
    B, L, D = x.shape
    hd = D // num_heads_q
    kv_dim = hd * num_heads_kv
    group = num_heads_q // num_heads_kv
    scale = 1.0 / math.sqrt(hd)
    qkv = x @ w_qkv.T
    q, k, v = jnp.split(qkv, [D, D + kv_dim], axis=-1)
    q = q.reshape(B, L, num_heads_q, hd).transpose(0, 2, 1, 3)
    k = k.reshape(B, L, num_heads_kv, hd).transpose(0, 2, 1, 3)
    v = v.reshape(B, L, num_heads_kv, hd).transpose(0, 2, 1, 3)
    k = jnp.repeat(k, group, axis=1)
    v = jnp.repeat(v, group, axis=1)
    s = jnp.einsum("bhqd,bhkd->bhqk", q, k) * scale
    if is_causal:
        mask = jnp.tril(jnp.ones((L, L), dtype=bool))
        s = jnp.where(mask, s, -jnp.inf)
    p = jax.nn.softmax(s, axis=-1)
    y = jnp.einsum("bhqk,bhkd->bhqd", p, v)
    y = y.transpose(0, 2, 1, 3).reshape(B, L, D)
    return y @ w_o.T


if __name__ == "__main__":
    # Small GQA config sized to exercise multi-tile flash attention and satisfy
    # lane alignment: D=256 (Hq=8, hd=32), Hkv=4 (kv_dim=128), L=512, causal.
    B, L, D = 2, 512, 256
    num_heads_q, num_heads_kv = 8, 4
    is_causal = True
    kv_dim = (D // num_heads_q) * num_heads_kv

    key = jax.random.PRNGKey(0)
    kx, kqkv, ko = jax.random.split(key, 3)
    x = jax.random.normal(kx, (B, L, D), dtype=jnp.float32)

    # nn.Linear-style deterministic init: U(-1/sqrt(in), 1/sqrt(in)), bias=False.
    bound = 1.0 / math.sqrt(D)
    w_qkv = jax.random.uniform(
        kqkv, (D + 2 * kv_dim, D), minval=-bound, maxval=bound, dtype=jnp.float32)
    w_o = jax.random.uniform(
        ko, (D, D), minval=-bound, maxval=bound, dtype=jnp.float32)

    out = mha_forward(
        x, w_qkv, w_o,
        num_heads_q=num_heads_q, num_heads_kv=num_heads_kv, is_causal=is_causal)
    jax.block_until_ready(out)
    assert out.shape == (B, L, D)

    ref = mha_reference(
        x, w_qkv, w_o,
        num_heads_q=num_heads_q, num_heads_kv=num_heads_kv, is_causal=is_causal)
    err = float(jnp.max(jnp.abs(out - ref)))
    assert err < 5e-2, f"max abs err vs reference too large: {err}"
    print("KERNEL_OK")
</pallas_src>

<mosaic_0001>
module attributes {stable_mosaic.version = 11 : i64} {
  func.func @_linear_kernel(%arg0: i32, %arg1: i32, %arg2: i32, %arg3: memref<256x256xf32, #tpu.memory_space<vmem>>, %arg4: memref<256x256xf32, #tpu.memory_space<vmem>>, %arg5: memref<256x256xf32, #tpu.memory_space<vmem>>, %arg6: memref<256x256xf32, #tpu.memory_space<vmem>>) attributes {dimension_semantics = [#tpu.dimension_semantics<parallel>, #tpu.dimension_semantics<parallel>, #tpu.dimension_semantics<arbitrary>], iteration_bounds = array<i64: 4, 2, 1>, scalar_prefetch = 0 : i64, scratch_operands = 1 : i64, tpu.core_type = #tpu.core_type<tc>, window_params = [{transform_indices = @transform_0, window_bounds = array<i64: 256, 256>}, {transform_indices = @transform_1, window_bounds = array<i64: 256, 256>}, {transform_indices = @transform_2, window_bounds = array<i64: 256, 256>}]} {
    %c0_i32 = arith.constant 0 : i32
    %0 = arith.cmpi eq, %arg2, %c0_i32 : i32
    %1 = arith.extui %0 : i1 to i32
    %c0_i32_0 = arith.constant 0 : i32
    %2 = arith.cmpi ne, %1, %c0_i32_0 : i32
    scf.if %2 {
      %cst_10 = arith.constant 0.000000e+00 : f32
      %12 = vector.broadcast %cst_10 : f32 to vector<256x256xf32>
      %c0_11 = arith.constant 0 : index
      %c0_12 = arith.constant 0 : index
      %13 = vector.load %arg6[%c0_11, %c0_12] : memref<256x256xf32, #tpu.memory_space<vmem>>, vector<256x256xf32>
      tpu.vector_store %arg6[%c0_11, %c0_12], %12 {strides = array<i32>} : memref<256x256xf32, #tpu.memory_space<vmem>>, vector<256x256xf32>,
    } else {
    }
    %c0 = arith.constant 0 : index
    %c0_1 = arith.constant 0 : index
    %3 = vector.load %arg6[%c0, %c0_1] : memref<256x256xf32, #tpu.memory_space<vmem>>, vector<256x256xf32>
    %c0_2 = arith.constant 0 : index
    %c0_3 = arith.constant 0 : index
    %4 = vector.load %arg3[%c0_2, %c0_3] : memref<256x256xf32, #tpu.memory_space<vmem>>, vector<256x256xf32>
    %c0_4 = arith.constant 0 : index
    %c0_5 = arith.constant 0 : index
    %5 = vector.load %arg4[%c0_4, %c0_5] : memref<256x256xf32, #tpu.memory_space<vmem>>, vector<256x256xf32>
    %cst = arith.constant dense<0.000000e+00> : vector<256x256xf32>
    %6 = tpu.matmul %4, %5, %cst {dimension_numbers = #tpu.dot_dimension_numbers<[1], [1], [0], [0], [0, 0, 1, 0], [], []>} : vector<256x256xf32>, vector<256x256xf32>, vector<256x256xf32> -> vector<256x256xf32>
    %7 = arith.addf %3, %6 : vector<256x256xf32>
    %c0_6 = arith.constant 0 : index
    %c0_7 = arith.constant 0 : index
    %8 = vector.load %arg6[%c0_6, %c0_7] : memref<256x256xf32, #tpu.memory_space<vmem>>, vector<256x256xf32>
    tpu.vector_store %arg6[%c0_6, %c0_7], %7 {strides = array<i32>} : memref<256x256xf32, #tpu.memory_space<vmem>>, vector<256x256xf32>,
    %c0_i32_8 = arith.constant 0 : i32
    %9 = arith.cmpi eq, %arg2, %c0_i32_8 : i32
    %10 = arith.extui %9 : i1 to i32
    %c0_i32_9 = arith.constant 0 : i32
    %11 = arith.cmpi ne, %10, %c0_i32_9 : i32
    scf.if %11 {
      %c0_10 = arith.constant 0 : index
      %c0_11 = arith.constant 0 : index
      %12 = vector.load %arg6[%c0_10, %c0_11] : memref<256x256xf32, #tpu.memory_space<vmem>>, vector<256x256xf32>
      %c0_12 = arith.constant 0 : index
      %c0_13 = arith.constant 0 : index
      %13 = vector.load %arg5[%c0_12, %c0_13] : memref<256x256xf32, #tpu.memory_space<vmem>>, vector<256x256xf32>
      tpu.vector_store %arg5[%c0_12, %c0_13], %12 {strides = array<i32>} : memref<256x256xf32, #tpu.memory_space<vmem>>, vector<256x256xf32>,
    } else {
    }
    return
  }
  func.func @transform_0(%arg0: i32, %arg1: i32, %arg2: i32) -> (i32, i32) {
    %c0_i32 = arith.constant 0 : i32
    return %arg0, %arg2 : i32, i32
  }
  func.func @transform_1(%arg0: i32, %arg1: i32, %arg2: i32) -> (i32, i32) {
    %c0_i32 = arith.constant 0 : i32
    return %arg1, %arg2 : i32, i32
  }
  func.func @transform_2(%arg0: i32, %arg1: i32, %arg2: i32) -> (i32, i32) {
    %c0_i32 = arith.constant 0 : i32
    return %arg0, %arg1 : i32, i32
  }
}

</mosaic_0001>

<llo_original>
// kernel: tpu_custom_call.1
$region0: #{tpu_custom_call.1}
  #allocation0 [shape = 'u32[]', space=smem, size = 0x4, offset = 0x4, fixed_abs, tag = 'smem constant byte address 0x4 - core index']
  #allocation1 [shape = 'u32[144,128]{1,0:T(1,128)}', space=vmem, size = 0x12000, scoped, tag = 'internal scratch']
  #allocation2 [shape = 'f32[256,256]{1,0:T(8,128)}', space=vmem, size = 0x40000, scoped, tag = 'scratch operand']
  %s0 = inlined_call_operand.hbm [shape: f32[1024,256], index: 0, kind: input, shape index: {}]
  %s1 = inlined_call_operand.hbm [shape: f32[512,256], index: 1, kind: input, shape index: {}]
  %s2 = inlined_call_operand.hbm [shape: f32[1024,512], index: 2, kind: output, shape index: {}]
  %s3 = sld [smem:[#allocation0]]
  $region57: #{tpu_custom_call.1} parent=0
    _
  %s5 = ssub.s32 1, %s3
  %s6 = scalar_select 0, %s5, %s3
  $region1: #{tpu_custom_call.1} parent=0
    #allocation3 [shape = 'u8[524288]{0}', space=vmem, size = 0x80000, scoped, tag = 'input window, operand 0']
    #allocation4 [shape = 's32[2]{0}', space=sflag, size = 0x8, scoped, tag = 'scoped memory for tpu_custom_call.1']
    #allocation5 [shape = 's32[2]{0}', space=sflag, size = 0x8, scoped, tag = 'scoped memory for tpu_custom_call.1']
    #allocation6 [shape = 'u8[524288]{0}', space=vmem, size = 0x80000, scoped, tag = 'input window, operand 1']
    #allocation7 [shape = 's32[2]{0}', space=sflag, size = 0x8, scoped, tag = 'scoped memory for tpu_custom_call.1']
    #allocation8 [shape = 'u8[524288]{0}', space=vmem, size = 0x80000, scoped, tag = 'output window, operand 0']
    %7 = vsyncpa [#allocation4], 0
    %s8 = scalar_lea.sflag [#allocation4], 1
    %9 = vsyncpa %s8, 0
    %10 = vsyncpa [#allocation7], 0
    %s11 = scalar_lea.sflag [#allocation7], 1
    %12 = vsyncpa %s11, 0
    %13 = vsyncpa [#allocation5], 0
    %s14 = scalar_lea.sflag [#allocation5], 1
    %15 = vsyncpa %s14, 0
    loop: start=0, step=1, limit=10
    $region2: #{tpu_custom_call.1} parent=1 // loop_pre_header
      _
    $region3: #{tpu_custom_call.1} parent=1 // loop_header
      %s17 = sphi 0, %s21
      %p18 = scmp.ge.s32.totalorder %s17, 10
      %s24 = sphi 0, %s43
      %s25 = sphi 0, %s39
      %s26 = sphi 0, %s35
      %s27 = sphi 0, %s24
      %s28 = sphi 0, %s25
      %s29 = sphi 0, %s26
      %s30 = sphi 0, %s27
      %s31 = sphi 0, %s28
      %s32 = sphi 0, %s29
      %s48 = sphi 0, %s50
      %s51 = sphi 0, %s48
      %s52 = sphi 0, %s51
      %s68 = sphi 0, %s52
      %s76 = sphi 0, %s78
      %s79 = sphi 0, %s76
      %s80 = sphi 0, %s79
      %s96 = sphi 0, %s80
      %s104 = sphi 0, %s106
      %s107 = sphi 0, %s104
      %s108 = sphi 0, %s107
      %s124 = sphi 0, %s108
    $region4: #{tpu_custom_call.1} parent=1 // loop_header_branch
      %20 = sbr.rel (%p18) target = $region8
    $region5: #{tpu_custom_call.1} parent=1 // loop_body
      %s22 = ssub.s32 %s17, 1
      %s23 = ssub.s32 %s17, 2
      %s33 = sadd.s32 1, %s26
      %p34 = scmp.ge.s32.totalorder %s33, 1
      %s35 = scalar_select %p34, 0, %s33
      %s36 = sadd.s32 1, %s25
      %s37 = scalar_select %p34, %s36, %s25
      %p38 = scmp.ge.s32.totalorder %s37, 2
      %s39 = scalar_select %p38, 0, %s37
      %s40 = sadd.s32 1, %s24
      %s41 = scalar_select %p38, %s40, %s24
      %p42 = scmp.ge.s32.totalorder %s41, 4
      %s43 = scalar_select %p42, 0, %s41
      %s44 = ssub.s32 %s24, %s43
      %s45 = ssub.s32 %s26, %s35
      %s46 = sor.u32 %s44, %s45
      %p47 = scmp.eq.s32.totalorder %s46, 0
      %s49 = sadd.s32 %s48, 1
      %s50 = scalar_select %p47, %s48, %s49
      %p53 = pneg %p47
      %p54 = scmp.eq.s32.totalorder %s17, 7
      %p55 = por %p53, %p54
      %p56 = scmp.ne.s32.totalorder %s48, %s51
      %p57 = scmp.eq.s32.totalorder %s17, 0
      %p58 = por %p56, %p57
      %p59 = scmp.ne.s32.totalorder %s48, %s51
      %p60 = scmp.eq.s32.totalorder %s22, 7
      %p61 = por %p59, %p60
      %p62 = scmp.ne.s32.totalorder %s51, %s52
      %p63 = scmp.eq.s32.totalorder %s22, 0
      %p64 = por %p62, %p63
      %p65 = scmp.ne.s32.totalorder %s51, %s52
      %p66 = scmp.eq.s32.totalorder %s23, 7
      %p67 = por %p65, %p66
      %p69 = scmp.ne.s32.totalorder %s52, %s68
      %p70 = scmp.eq.s32.totalorder %s23, 0
      %p71 = por %p69, %p70
      %s72 = ssub.s32 %s25, %s39
      %s73 = ssub.s32 %s26, %s35
      %s74 = sor.u32 %s72, %s73
      %p75 = scmp.eq.s32.totalorder %s74, 0
      %s77 = sadd.s32 %s76, 1
      %s78 = scalar_select %p75, %s76, %s77
      %p81 = pneg %p75
      %p82 = scmp.eq.s32.totalorder %s17, 7
      %p83 = por %p81, %p82
      %p84 = scmp.ne.s32.totalorder %s76, %s79
      %p85 = scmp.eq.s32.totalorder %s17, 0
      %p86 = por %p84, %p85
      %p87 = scmp.ne.s32.totalorder %s76, %s79
      %p88 = scmp.eq.s32.totalorder %s22, 7
      %p89 = por %p87, %p88
      %p90 = scmp.ne.s32.totalorder %s79, %s80
      %p91 = scmp.eq.s32.totalorder %s22, 0
      %p92 = por %p90, %p91
      %p93 = scmp.ne.s32.totalorder %s79, %s80
      %p94 = scmp.eq.s32.totalorder %s23, 7
      %p95 = por %p93, %p94
      %p97 = scmp.ne.s32.totalorder %s80, %s96
      %p98 = scmp.eq.s32.totalorder %s23, 0
      %p99 = por %p97, %p98
      %s100 = ssub.s32 %s24, %s43
      %s101 = ssub.s32 %s25, %s39
      %s102 = sor.u32 %s100, %s101
      %p103 = scmp.eq.s32.totalorder %s102, 0
      %s105 = sadd.s32 %s104, 1
      %s106 = scalar_select %p103, %s104, %s105
      %p109 = pneg %p103
      %p110 = scmp.eq.s32.totalorder %s17, 7
      %p111 = por %p109, %p110
      %p112 = scmp.ne.s32.totalorder %s104, %s107
      %p113 = scmp.eq.s32.totalorder %s17, 0
      %p114 = por %p112, %p113
      %p115 = scmp.ne.s32.totalorder %s104, %s107
      %p116 = scmp.eq.s32.totalorder %s22, 7
      %p117 = por %p115, %p116
      %p118 = scmp.ne.s32.totalorder %s107, %s108
      %p119 = scmp.eq.s32.totalorder %s22, 0
      %p120 = por %p118, %p119
      %p121 = scmp.ne.s32.totalorder %s107, %s108
      %p122 = scmp.eq.s32.totalorder %s23, 7
      %p123 = por %p121, %p122
      %p125 = scmp.ne.s32.totalorder %s108, %s124
      %p126 = scmp.eq.s32.totalorder %s23, 0
      %p127 = por %p125, %p126
      %p128 = scmp.le.s32.totalorder 1, %s17
      %p129 = scmp.lt.s32.totalorder %s17, 9
      %p130 = pnand %p128, %p129
      %p131 = pneg %p130
      // Predicated region
      $region9: #{tpu_custom_call.1} parent=5 // pred_check
        _
      $region10: #{tpu_custom_call.1} parent=5 // pred_check_branch
        %133 = sbr.rel (%p130) target = $region12
      $region11: #{tpu_custom_call.1} parent=5 // pred_region
        %s134 = ssub.s32 %s17, 1
      $region12: #{tpu_custom_call.1} parent=5 // pred_fallthru
        _
      %p135 = scmp.lt.s32.totalorder %s17, 8
      // Predicated region
      $region13: #{tpu_custom_call.1} parent=5 // pred_check
        %p136 = pneg %p135
      $region14: #{tpu_custom_call.1} parent=5 // pred_check_branch
        %138 = sbr.rel (%p136) target = $region16
      $region15: #{tpu_custom_call.1} parent=5 // pred_region
        // Predicated region
        $region17: #{tpu_custom_call.1} parent=15 // pred_check
          %p139 = pneg %p58
        $region18: #{tpu_custom_call.1} parent=15 // pred_check_branch
          %141 = sbr.rel (%p139) target = $region20
        $region19: #{tpu_custom_call.1} parent=15 // pred_region
          %s142 = sand.u32 %s48, 1
          %s143 = scalar_lea.sflag [#allocation4], %s142
          %s144 = sand.u32 %s48, 1
          %s145 = smul.addr %s144, 512
          %s146 = scalar_lea.vmem [#allocation3], %s145
          %s147 = smul.u32 32, %s24
          %s148 = smul.u32 2, %s26
          %s150 = ssub.s32 8192, 8192
          %151 = vsyncadd %s143, %s150
          %s152 = smul.addr %s147, 2
          %s153 = sadd.s32 %s148, %s152
          %s154 = smul.addr %s153, 128
          %s155 = scalar_lea.hbm %s0, %s154
          %s156 = sshll.u32 %s146, 4
          %s157 = int_to_ptr.vmem [resolvable:$true] %s156
          %162 = dma.hbm_to_vmem [thread:$0]  %s155, 8192, %s157, %s143, 256, 256, 16
        $region20: #{tpu_custom_call.1} parent=15 // pred_fallthru
          _
        // Predicated region
        $region21: #{tpu_custom_call.1} parent=15 // pred_check
          %p163 = pneg %p86
        $region22: #{tpu_custom_call.1} parent=15 // pred_check_branch
          %165 = sbr.rel (%p163) target = $region24
        $region23: #{tpu_custom_call.1} parent=15 // pred_region
          %s166 = sand.u32 %s76, 1
          %s167 = scalar_lea.sflag [#allocation7], %s166
          %s168 = sand.u32 %s76, 1
          %s169 = smul.addr %s168, 512
          %s170 = scalar_lea.vmem [#allocation6], %s169
          %s171 = smul.u32 32, %s25
          %s172 = smul.u32 2, %s26
          %s174 = ssub.s32 8192, 8192
          %175 = vsyncadd %s167, %s174
          %s176 = smul.addr %s171, 2
          %s177 = sadd.s32 %s172, %s176
          %s178 = smul.addr %s177, 128
          %s179 = scalar_lea.hbm %s1, %s178
          %s180 = sshll.u32 %s170, 4
          %s181 = int_to_ptr.vmem [resolvable:$true] %s180
          %186 = dma.hbm_to_vmem [thread:$0]  %s179, 8192, %s181, %s167, 256, 256, 16
        $region24: #{tpu_custom_call.1} parent=15 // pred_fallthru
          _
      $region16: #{tpu_custom_call.1} parent=5 // pred_fallthru
        _
      %p187 = scmp.le.s32.totalorder 1, %s17
      %p188 = scmp.lt.s32.totalorder %s17, 9
      %p189 = pnand %p187, %p188
      %p190 = pneg %p189
      // Predicated region
      $region25: #{tpu_custom_call.1} parent=5 // pred_check
        _
      $region26: #{tpu_custom_call.1} parent=5 // pred_check_branch
        %192 = sbr.rel (%p189) target = $region28
      $region27: #{tpu_custom_call.1} parent=5 // pred_region
        %s193 = ssub.s32 %s17, 1
        %s194 = sand.u32 %s51, 1
        %s195 = scalar_lea.sflag [#allocation4], %s194
        %s196 = sand.u32 %s51, 1
        %s197 = smul.addr %s196, 512
        %s198 = scalar_lea.vmem [#allocation3], %s197
        // Predicated region
        $region29: #{tpu_custom_call.1} parent=27 // pred_check
          %p199 = pneg %p64
        $region30: #{tpu_custom_call.1} parent=27 // pred_check_branch
          %201 = sbr.rel (%p199) target = $region32
        $region31: #{tpu_custom_call.1} parent=27 // pred_region
          %202 = dma.done %s195, 8192
        $region32: #{tpu_custom_call.1} parent=27 // pred_fallthru
          _
        %s203 = sand.u32 %s79, 1
        %s204 = scalar_lea.sflag [#allocation7], %s203
        %s205 = sand.u32 %s79, 1
        %s206 = smul.addr %s205, 512
        %s207 = scalar_lea.vmem [#allocation6], %s206
        // Predicated region
        $region33: #{tpu_custom_call.1} parent=27 // pred_check
          %p208 = pneg %p92
        $region34: #{tpu_custom_call.1} parent=27 // pred_check_branch
          %210 = sbr.rel (%p208) target = $region36
        $region35: #{tpu_custom_call.1} parent=27 // pred_region
          %211 = dma.done %s204, 8192
        $region36: #{tpu_custom_call.1} parent=27 // pred_fallthru
          _
        %s212 = sand.u32 %s51, 1
        %s213 = scalar_lea.sflag [#allocation4], %s212
        %s214 = sand.u32 %s51, 1
        %s215 = smul.addr %s214, 512
        %s216 = scalar_lea.vmem [#allocation3], %s215
        %p217 = pneg %p64
        %p218 = pneg %p61
        %s219 = sand.u32 %s79, 1
        %s220 = scalar_lea.sflag [#allocation7], %s219
        %s221 = sand.u32 %s79, 1
        %s222 = smul.addr %s221, 512
        %s223 = scalar_lea.vmem [#allocation6], %s222
        %p224 = pneg %p92
        %p225 = pneg %p89
        %p226 = pneg %p120
        %p227 = pneg %p117
        %s228 = sand.u32 %s107, 1
        %s229 = scalar_lea.sflag [#allocation5], %s228
        %s230 = sand.u32 %s107, 1
        %s231 = smul.addr %s230, 512
        %s232 = scalar_lea.vmem [#allocation8], %s231
        %s233 = smul.u32 32, %s27
        %s234 = smul.u32 2, %s29
        %s235 = smul.u32 32, %s28
        %s236 = smul.u32 2, %s29
        %s237 = smul.u32 32, %s27
        %s238 = smul.u32 2, %s28
        %p239 = scmp.eq.s32.totalorder %s29, 0
        // Predicated region
        $region37: #{tpu_custom_call.1} parent=27 // pred_check
          %p240 = pneg %p239
        $region38: #{tpu_custom_call.1} parent=27 // pred_check_branch
          %242 = sbr.rel (%p240) target = $region40
        $region39: #{tpu_custom_call.1} parent=27 // pred_region
          %243 = vst [vmem:[#allocation2] sm:$0xff] 0.0
          %244 = vst [vmem:[#allocation2 + $0x8] sm:$0xff] 0.0
          %245 = vst [vmem:[#allocation2 + $0x10] sm:$0xff] 0.0
          %246 = vst [vmem:[#allocation2 + $0x18] sm:$0xff] 0.0
          %247 = vst [vmem:[#allocation2 + $0x20] sm:$0xff] 0.0
          %248 = vst [vmem:[#allocation2 + $0x28] sm:$0xff] 0.0
          %249 = vst [vmem:[#allocation2 + $0x30] sm:$0xff] 0.0
          %250 = vst [vmem:[#allocation2 + $0x38] sm:$0xff] 0.0
          %251 = vst [vmem:[#allocation2 + $0x40] sm:$0xff] 0.0
          %252 = vst [vmem:[#allocation2 + $0x48] sm:$0xff] 0.0
          %253 = vst [vmem:[#allocation2 + $0x50] sm:$0xff] 0.0
          %254 = vst [vmem:[#allocation2 + $0x58] sm:$0xff] 0.0
          %255 = vst [vmem:[#allocation2 + $0x60] sm:$0xff] 0.0
          %256 = vst [vmem:[#allocation2 + $0x68] sm:$0xff] 0.0
          %257 = vst [vmem:[#allocation2 + $0x70] sm:$0xff] 0.0
          %258 = vst [vmem:[#allocation2 + $0x78] sm:$0xff] 0.0
          %259 = vst [vmem:[#allocation2 + $0x80] sm:$0xff] 0.0
          %260 = vst [vmem:[#allocation2 + $0x88] sm:$0xff] 0.0
          %261 = vst [vmem:[#allocation2 + $0x90] sm:$0xff] 0.0
          %262 = vst [vmem:[#allocation2 + $0x98] sm:$0xff] 0.0
          %263 = vst [vmem:[#allocation2 + $0xa0] sm:$0xff] 0.0
          %264 = vst [vmem:[#allocation2 + $0xa8] sm:$0xff] 0.0
          %265 = vst [vmem:[#allocation2 + $0xb0] sm:$0xff] 0.0
          %266 = vst [vmem:[#allocation2 + $0xb8] sm:$0xff] 0.0
          %267 = vst [vmem:[#allocation2 + $0xc0] sm:$0xff] 0.0
          %268 = vst [vmem:[#allocation2 + $0xc8] sm:$0xff] 0.0
          %269 = vst [vmem:[#allocation2 + $0xd0] sm:$0xff] 0.0
          %270 = vst [vmem:[#allocation2 + $0xd8] sm:$0xff] 0.0
          %271 = vst [vmem:[#allocation2 + $0xe0] sm:$0xff] 0.0
          %272 = vst [vmem:[#allocation2 + $0xe8] sm:$0xff] 0.0
          %273 = vst [vmem:[#allocation2 + $0xf0] sm:$0xff] 0.0
          %274 = vst [vmem:[#allocation2 + $0xf8] sm:$0xff] 0.0
          %275 = vst [vmem:[#allocation2 + $0x100] sm:$0xff] 0.0
          %276 = vst [vmem:[#allocation2 + $0x108] sm:$0xff] 0.0
          %277 = vst [vmem:[#allocation2 + $0x110] sm:$0xff] 0.0
          %278 = vst [vmem:[#allocation2 + $0x118] sm:$0xff] 0.0
          %279 = vst [vmem:[#allocation2 + $0x120] sm:$0xff] 0.0
          %280 = vst [vmem:[#allocation2 + $0x128] sm:$0xff] 0.0
          %281 = vst [vmem:[#allocation2 + $0x130] sm:$0xff] 0.0
          %282 = vst [vmem:[#allocation2 + $0x138] sm:$0xff] 0.0
          %283 = vst [vmem:[#allocation2 + $0x140] sm:$0xff] 0.0
          %284 = vst [vmem:[#allocation2 + $0x148] sm:$0xff] 0.0
          %285 = vst [vmem:[#allocation2 + $0x150] sm:$0xff] 0.0
          %286 = vst [vmem:[#allocation2 + $0x158] sm:$0xff] 0.0
          %287 = vst [vmem:[#allocation2 + $0x160] sm:$0xff] 0.0
          %288 = vst [vmem:[#allocation2 + $0x168] sm:$0xff] 0.0
          %289 = vst [vmem:[#allocation2 + $0x170] sm:$0xff] 0.0
          %290 = vst [vmem:[#allocation2 + $0x178] sm:$0xff] 0.0
          %291 = vst [vmem:[#allocation2 + $0x180] sm:$0xff] 0.0
          %292 = vst [vmem:[#allocation2 + $0x188] sm:$0xff] 0.0
          %293 = vst [vmem:[#allocation2 + $0x190] sm:$0xff] 0.0
          %294 = vst [vmem:[#allocation2 + $0x198] sm:$0xff] 0.0
          %295 = vst [vmem:[#allocation2 + $0x1a0] sm:$0xff] 0.0
          %296 = vst [vmem:[#allocation2 + $0x1a8] sm:$0xff] 0.0
          %297 = vst [vmem:[#allocation2 + $0x1b0] sm:$0xff] 0.0
          %298 = vst [vmem:[#allocation2 + $0x1b8] sm:$0xff] 0.0
          %299 = vst [vmem:[#allocation2 + $0x1c0] sm:$0xff] 0.0
          %300 = vst [vmem:[#allocation2 + $0x1c8] sm:$0xff] 0.0
          %301 = vst [vmem:[#allocation2 + $0x1d0] sm:$0xff] 0.0
          %302 = vst [vmem:[#allocation2 + $0x1d8] sm:$0xff] 0.0
          %303 = vst [vmem:[#allocation2 + $0x1e0] sm:$0xff] 0.0
          %304 = vst [vmem:[#allocation2 + $0x1e8] sm:$0xff] 0.0
          %305 = vst [vmem:[#allocation2 + $0x1f0] sm:$0xff] 0.0
          %306 = vst [vmem:[#allocation2 + $0x1f8] sm:$0xff] 0.0
        $region40: #{tpu_custom_call.1} parent=27 // pred_fallthru
          _
        %v307 = vld [vmem:[#allocation2] sm:$0xff]
        %v308 = vld [vmem:[#allocation2 + $0x8] sm:$0xff]
        %v309 = vld [vmem:[#allocation2 + $0x10] sm:$0xff]
        %v310 = vld [vmem:[#allocation2 + $0x18] sm:$0xff]
        %v311 = vld [vmem:[#allocation2 + $0x20] sm:$0xff]
        %v312 = vld [vmem:[#allocation2 + $0x28] sm:$0xff]
        %v313 = vld [vmem:[#allocation2 + $0x30] sm:$0xff]
        %v314 = vld [vmem:[#allocation2 + $0x38] sm:$0xff]
        %v315 = vld [vmem:[#allocation2 + $0x40] sm:$0xff]
        %v316 = vld [vmem:[#allocation2 + $0x48] sm:$0xff]
        %v317 = vld [vmem:[#allocation2 + $0x50] sm:$0xff]
        %v318 = vld [vmem:[#allocation2 + $0x58] sm:$0xff]
        %v319 = vld [vmem:[#allocation2 + $0x60] sm:$0xff]
        %v320 = vld [vmem:[#allocation2 + $0x68] sm:$0xff]
        %v321 = vld [vmem:[#allocation2 + $0x70] sm:$0xff]
        %v322 = vld [vmem:[#allocation2 + $0x78] sm:$0xff]
        %v323 = vld [vmem:[#allocation2 + $0x80] sm:$0xff]
        %v324 = vld [vmem:[#allocation2 + $0x88] sm:$0xff]
        %v325 = vld [vmem:[#allocation2 + $0x90] sm:$0xff]
        %v326 = vld [vmem:[#allocation2 + $0x98] sm:$0xff]
        %v327 = vld [vmem:[#allocation2 + $0xa0] sm:$0xff]
        %v328 = vld [vmem:[#allocation2 + $0xa8] sm:$0xff]
        %v329 = vld [vmem:[#allocation2 + $0xb0] sm:$0xff]
        %v330 = vld [vmem:[#allocation2 + $0xb8] sm:$0xff]
        %v331 = vld [vmem:[#allocation2 + $0xc0] sm:$0xff]
        %v332 = vld [vmem:[#allocation2 + $0xc8] sm:$0xff]
        %v333 = vld [vmem:[#allocation2 + $0xd0] sm:$0xff]
        %v334 = vld [vmem:[#allocation2 + $0xd8] sm:$0xff]
        %v335 = vld [vmem:[#allocation2 + $0xe0] sm:$0xff]
        %v336 = vld [vmem:[#allocation2 + $0xe8] sm:$0xff]
        %v337 = vld [vmem:[#allocation2 + $0xf0] sm:$0xff]
        %v338 = vld [vmem:[#allocation2 + $0xf8] sm:$0xff]
        %v339 = vld [vmem:[#allocation2 + $0x100] sm:$0xff]
        %v340 = vld [vmem:[#allocation2 + $0x108] sm:$0xff]
        %v341 = vld [vmem:[#allocation2 + $0x110] sm:$0xff]
        %v342 = vld [vmem:[#allocation2 + $0x118] sm:$0xff]
        %v343 = vld [vmem:[#allocation2 + $0x120] sm:$0xff]
        %v344 = vld [vmem:[#allocation2 + $0x128] sm:$0xff]
        %v345 = vld [vmem:[#allocation2 + $0x130] sm:$0xff]
        %v346 = vld [vmem:[#allocation2 + $0x138] sm:$0xff]
        %v347 = vld [vmem:[#allocation2 + $0x140] sm:$0xff]
        %v348 = vld [vmem:[#allocation2 + $0x148] sm:$0xff]
        %v349 = vld [vmem:[#allocation2 + $0x150] sm:$0xff]
        %v350 = vld [vmem:[#allocation2 + $0x158] sm:$0xff]
        %v351 = vld [vmem:[#allocation2 + $0x160] sm:$0xff]
        %v352 = vld [vmem:[#allocation2 + $0x168] sm:$0xff]
        %v353 = vld [vmem:[#allocation2 + $0x170] sm:$0xff]
        %v354 = vld [vmem:[#allocation2 + $0x178] sm:$0xff]
        %v355 = vld [vmem:[#allocation2 + $0x180] sm:$0xff]
        %v356 = vld [vmem:[#allocation2 + $0x188] sm:$0xff]
        %v357 = vld [vmem:[#allocation2 + $0x190] sm:$0xff]
        %v358 = vld [vmem:[#allocation2 + $0x198] sm:$0xff]
        %v359 = vld [vmem:[#allocation2 + $0x1a0] sm:$0xff]
        %v360 = vld [vmem:[#allocation2 + $0x1a8] sm:$0xff]
        %v361 = vld [vmem:[#allocation2 + $0x1b0] sm:$0xff]
        %v362 = vld [vmem:[#allocation2 + $0x1b8] sm:$0xff]
        %v363 = vld [vmem:[#allocation2 + $0x1c0] sm:$0xff]
        %v364 = vld [vmem:[#allocation2 + $0x1c8] sm:$0xff]
        %v365 = vld [vmem:[#allocation2 + $0x1d0] sm:$0xff]
        %v366 = vld [vmem:[#allocation2 + $0x1d8] sm:$0xff]
        %v367 = vld [vmem:[#allocation2 + $0x1e0] sm:$0xff]
        %v368 = vld [vmem:[#allocation2 + $0x1e8] sm:$0xff]
        %v369 = vld [vmem:[#allocation2 + $0x1f0] sm:$0xff]
        %v370 = vld [vmem:[#allocation2 + $0x1f8] sm:$0xff]
        %v371 = vld [vmem:[%s198] sm:$0xff]
        %v372 = vld [vmem:[%s198 + $0x8] sm:$0xff]
        %v373 = vld [vmem:[%s198 + $0x10] sm:$0xff]
        %v374 = vld [vmem:[%s198 + $0x18] sm:$0xff]
        %v375 = vld [vmem:[%s198 + $0x20] sm:$0xff]
        %v376 = vld [vmem:[%s198 + $0x28] sm:$0xff]
        %v377 = vld [vmem:[%s198 + $0x30] sm:$0xff]
        %v378 = vld [vmem:[%s198 + $0x38] sm:$0xff]
        %v379 = vld [vmem:[%s198 + $0x40] sm:$0xff]
        %v380 = vld [vmem:[%s198 + $0x48] sm:$0xff]
        %v381 = vld [vmem:[%s198 + $0x50] sm:$0xff]
        %v382 = vld [vmem:[%s198 + $0x58] sm:$0xff]
        %v383 = vld [vmem:[%s198 + $0x60] sm:$0xff]
        %v384 = vld [vmem:[%s198 + $0x68] sm:$0xff]
        %v385 = vld [vmem:[%s198 + $0x70] sm:$0xff]
        %v386 = vld [vmem:[%s198 + $0x78] sm:$0xff]
        %v387 = vld [vmem:[%s198 + $0x80] sm:$0xff]
        %v388 = vld [vmem:[%s198 + $0x88] sm:$0xff]
        %v389 = vld [vmem:[%s198 + $0x90] sm:$0xff]
        %v390 = vld [vmem:[%s198 + $0x98] sm:$0xff]
        %v391 = vld [vmem:[%s198 + $0xa0] sm:$0xff]
        %v392 = vld [vmem:[%s198 + $0xa8] sm:$0xff]
        %v393 = vld [vmem:[%s198 + $0xb0] sm:$0xff]
        %v394 = vld [vmem:[%s198 + $0xb8] sm:$0xff]
        %v395 = vld [vmem:[%s198 + $0xc0] sm:$0xff]
        %v396 = vld [vmem:[%s198 + $0xc8] sm:$0xff]
        %v397 = vld [vmem:[%s198 + $0xd0] sm:$0xff]
        %v398 = vld [vmem:[%s198 + $0xd8] sm:$0xff]
        %v399 = vld [vmem:[%s198 + $0xe0] sm:$0xff]
        %v400 = vld [vmem:[%s198 + $0xe8] sm:$0xff]
        %v401 = vld [vmem:[%s198 + $0xf0] sm:$0xff]
        %v402 = vld [vmem:[%s198 + $0xf8] sm:$0xff]
        %v403 = vld [vmem:[%s198 + $0x100] sm:$0xff]
        %v404 = vld [vmem:[%s198 + $0x108] sm:$0xff]
        %v405 = vld [vmem:[%s198 + $0x110] sm:$0xff]
        %v406 = vld [vmem:[%s198 + $0x118] sm:$0xff]
        %v407 = vld [vmem:[%s198 + $0x120] sm:$0xff]
        %v408 = vld [vmem:[%s198 + $0x128] sm:$0xff]
        %v409 = vld [vmem:[%s198 + $0x130] sm:$0xff]
        %v410 = vld [vmem:[%s198 + $0x138] sm:$0xff]
        %v411 = vld [vmem:[%s198 + $0x140] sm:$0xff]
        %v412 = vld [vmem:[%s198 + $0x148] sm:$0xff]
        %v413 = vld [vmem:[%s198 + $0x150] sm:$0xff]
        %v414 = vld [vmem:[%s198 + $0x158] sm:$0xff]
        %v415 = vld [vmem:[%s198 + $0x160] sm:$0xff]
        %v416 = vld [vmem:[%s198 + $0x168] sm:$0xff]
        %v417 = vld [vmem:[%s198 + $0x170] sm:$0xff]
        %v418 = vld [vmem:[%s198 + $0x178] sm:$0xff]
        %v419 = vld [vmem:[%s198 + $0x180] sm:$0xff]
        %v420 = vld [vmem:[%s198 + $0x188] sm:$0xff]
        %v421 = vld [vmem:[%s198 + $0x190] sm:$0xff]
        %v422 = vld [vmem:[%s198 + $0x198] sm:$0xff]
        %v423 = vld [vmem:[%s198 + $0x1a0] sm:$0xff]
        %v424 = vld [vmem:[%s198 + $0x1a8] sm:$0xff]
        %v425 = vld [vmem:[%s198 + $0x1b0] sm:$0xff]
        %v426 = vld [vmem:[%s198 + $0x1b8] sm:$0xff]
        %v427 = vld [vmem:[%s198 + $0x1c0] sm:$0xff]
        %v428 = vld [vmem:[%s198 + $0x1c8] sm:$0xff]
        %v429 = vld [vmem:[%s198 + $0x1d0] sm:$0xff]
        %v430 = vld [vmem:[%s198 + $0x1d8] sm:$0xff]
        %v431 = vld [vmem:[%s198 + $0x1e0] sm:$0xff]
        %v432 = vld [vmem:[%s198 + $0x1e8] sm:$0xff]
        %v433 = vld [vmem:[%s198 + $0x1f0] sm:$0xff]
        %v434 = vld [vmem:[%s198 + $0x1f8] sm:$0xff]
        %v435 = vld [vmem:[%s207] sm:$0xff]
        %v436 = vld [vmem:[%s207 + $0x8] sm:$0xff]
        %v437 = vld [vmem:[%s207 + $0x10] sm:$0xff]
        %v438 = vld [vmem:[%s207 + $0x18] sm:$0xff]
        %v439 = vld [vmem:[%s207 + $0x20] sm:$0xff]
        %v440 = vld [vmem:[%s207 + $0x28] sm:$0xff]
        %v441 = vld [vmem:[%s207 + $0x30] sm:$0xff]
        %v442 = vld [vmem:[%s207 + $0x38] sm:$0xff]
        %v443 = vld [vmem:[%s207 + $0x40] sm:$0xff]
        %v444 = vld [vmem:[%s207 + $0x48] sm:$0xff]
        %v445 = vld [vmem:[%s207 + $0x50] sm:$0xff]
        %v446 = vld [vmem:[%s207 + $0x58] sm:$0xff]
        %v447 = vld [vmem:[%s207 + $0x60] sm:$0xff]
        %v448 = vld [vmem:[%s207 + $0x68] sm:$0xff]
        %v449 = vld [vmem:[%s207 + $0x70] sm:$0xff]
        %v450 = vld [vmem:[%s207 + $0x78] sm:$0xff]
        %v451 = vld [vmem:[%s207 + $0x80] sm:$0xff]
        %v452 = vld [vmem:[%s207 + $0x88] sm:$0xff]
        %v453 = vld [vmem:[%s207 + $0x90] sm:$0xff]
        %v454 = vld [vmem:[%s207 + $0x98] sm:$0xff]
        %v455 = vld [vmem:[%s207 + $0xa0] sm:$0xff]
        %v456 = vld [vmem:[%s207 + $0xa8] sm:$0xff]
        %v457 = vld [vmem:[%s207 + $0xb0] sm:$0xff]
        %v458 = vld [vmem:[%s207 + $0xb8] sm:$0xff]
        %v459 = vld [vmem:[%s207 + $0xc0] sm:$0xff]
        %v460 = vld [vmem:[%s207 + $0xc8] sm:$0xff]
        %v461 = vld [vmem:[%s207 + $0xd0] sm:$0xff]
        %v462 = vld [vmem:[%s207 + $0xd8] sm:$0xff]
        %v463 = vld [vmem:[%s207 + $0xe0] sm:$0xff]
        %v464 = vld [vmem:[%s207 + $0xe8] sm:$0xff]
        %v465 = vld [vmem:[%s207 + $0xf0] sm:$0xff]
        %v466 = vld [vmem:[%s207 + $0xf8] sm:$0xff]
        %v467 = vld [vmem:[%s207 + $0x100] sm:$0xff]
        %v468 = vld [vmem:[%s207 + $0x108] sm:$0xff]
        %v469 = vld [vmem:[%s207 + $0x110] sm:$0xff]
        %v470 = vld [vmem:[%s207 + $0x118] sm:$0xff]
        %v471 = vld [vmem:[%s207 + $0x120] sm:$0xff]
        %v472 = vld [vmem:[%s207 + $0x128] sm:$0xff]
        %v473 = vld [vmem:[%s207 + $0x130] sm:$0xff]
        %v474 = vld [vmem:[%s207 + $0x138] sm:$0xff]
        %v475 = vld [vmem:[%s207 + $0x140] sm:$0xff]
        %v476 = vld [vmem:[%s207 + $0x148] sm:$0xff]
        %v477 = vld [vmem:[%s207 + $0x150] sm:$0xff]
        %v478 = vld [vmem:[%s207 + $0x158] sm:$0xff]
        %v479 = vld [vmem:[%s207 + $0x160] sm:$0xff]
        %v480 = vld [vmem:[%s207 + $0x168] sm:$0xff]
        %v481 = vld [vmem:[%s207 + $0x170] sm:$0xff]
        %v482 = vld [vmem:[%s207 + $0x178] sm:$0xff]
        %v483 = vld [vmem:[%s207 + $0x180] sm:$0xff]
        %v484 = vld [vmem:[%s207 + $0x188] sm:$0xff]
        %v485 = vld [vmem:[%s207 + $0x190] sm:$0xff]
        %v486 = vld [vmem:[%s207 + $0x198] sm:$0xff]
        %v487 = vld [vmem:[%s207 + $0x1a0] sm:$0xff]
        %v488 = vld [vmem:[%s207 + $0x1a8] sm:$0xff]
        %v489 = vld [vmem:[%s207 + $0x1b0] sm:$0xff]
        %v490 = vld [vmem:[%s207 + $0x1b8] sm:$0xff]
        %v491 = vld [vmem:[%s207 + $0x1c0] sm:$0xff]
        %v492 = vld [vmem:[%s207 + $0x1c8] sm:$0xff]
        %v493 = vld [vmem:[%s207 + $0x1d0] sm:$0xff]
        %v494 = vld [vmem:[%s207 + $0x1d8] sm:$0xff]
        %v495 = vld [vmem:[%s207 + $0x1e0] sm:$0xff]
        %v496 = vld [vmem:[%s207 + $0x1e8] sm:$0xff]
        %v497 = vld [vmem:[%s207 + $0x1f0] sm:$0xff]
        %v498 = vld [vmem:[%s207 + $0x1f8] sm:$0xff]
        %499 = vmatprep.subr.mxu0 %v436
        %500 = vmatpush1.xpose.msra.mxu0 %v435
        %501 = vmatprep.subr.mxu0 %v438
        %502 = vmatpush1.xpose.msra.mxu0 %v437
        %503 = vmatprep.subr.mxu0 %v440
        %504 = vmatpush1.xpose.msra.mxu0 %v439
        %505 = vmatprep.subr.mxu0 %v442
        %506 = vmatpush1.xpose.msra.mxu0 %v441
        %507 = vmatprep.subr.mxu0 %v444
        %508 = vmatpush1.xpose.msra.mxu0 %v443
        %509 = vmatprep.subr.mxu0 %v446
        %510 = vmatpush1.xpose.msra.mxu0 %v445
        %511 = vmatprep.subr.mxu0 %v448
        %512 = vmatpush1.xpose.msra.mxu0 %v447
        %513 = vmatprep.subr.mxu0 %v450
        %514 = vmatpush1.xpose.msra.mxu0 %v449
        %515 = vmatprep.subr.mxu0 %v452
        %516 = vmatpush1.xpose.msra.mxu0 %v451
        %517 = vmatprep.subr.mxu0 %v454
        %518 = vmatpush1.xpose.msra.mxu0 %v453
        %519 = vmatprep.subr.mxu0 %v456
        %520 = vmatpush1.xpose.msra.mxu0 %v455
        %521 = vmatprep.subr.mxu0 %v458
        %522 = vmatpush1.xpose.msra.mxu0 %v457
        %523 = vmatprep.subr.mxu0 %v460
        %524 = vmatpush1.xpose.msra.mxu0 %v459
        %525 = vmatprep.subr.mxu0 %v462
        %526 = vmatpush1.xpose.msra.mxu0 %v461
        %527 = vmatprep.subr.mxu0 %v464
        %528 = vmatpush1.xpose.msra.mxu0 %v463
        %529 = vmatprep.subr.mxu0 %v466
        %530 = vmatpush1.xpose.msra.mxu0 %v465
        %531 = vmatprep.subr.mxu0 %v468
        %532 = vmatpush1.xpose.msra.mxu0 %v467
        %533 = vmatprep.subr.mxu0 %v470
        %534 = vmatpush1.xpose.msra.mxu0 %v469
        %535 = vmatprep.subr.mxu0 %v472
        %536 = vmatpush1.xpose.msra.mxu0 %v471
        %537 = vmatprep.subr.mxu0 %v474
        %538 = vmatpush1.xpose.msra.mxu0 %v473
        %539 = vmatprep.subr.mxu0 %v476
        %540 = vmatpush1.xpose.msra.mxu0 %v475
        %541 = vmatprep.subr.mxu0 %v478
        %542 = vmatpush1.xpose.msra.mxu0 %v477
        %543 = vmatprep.subr.mxu0 %v480
        %544 = vmatpush1.xpose.msra.mxu0 %v479
        %545 = vmatprep.subr.mxu0 %v482
        %546 = vmatpush1.xpose.msra.mxu0 %v481
        %547 = vmatprep.subr.mxu0 %v484
        %548 = vmatpush1.xpose.msra.mxu0 %v483
        %549 = vmatprep.subr.mxu0 %v486
        %550 = vmatpush1.xpose.msra.mxu0 %v485
        %551 = vmatprep.subr.mxu0 %v488
        %552 = vmatpush1.xpose.msra.mxu0 %v487
        %553 = vmatprep.subr.mxu0 %v490
        %554 = vmatpush1.xpose.msra.mxu0 %v489
        %555 = vmatprep.subr.mxu0 %v492
        %556 = vmatpush1.xpose.msra.mxu0 %v491
        %557 = vmatprep.subr.mxu0 %v494
        %558 = vmatpush1.xpose.msra.mxu0 %v493
        %559 = vmatprep.subr.mxu0 %v496
        %560 = vmatpush1.xpose.msra.mxu0 %v495
        %561 = vmatprep.subr.mxu0 %v498
        %562 = vmatpush1.xpose.msra.mxu0 %v497
        %563 = vmatprep.mubr.f32.mxu0 %v372
        %564 = vmatmul.mubr.f32.gmra.mrb[0].mxu0 %v371
        %v565 = vpop.f32.mrb[0].mxu0
        %v566 = vadd.f32 0.0, %v565
        %v567 = vpop.f32.mrb[0].mxu0
        %v568 = vadd.f32 0.0, %v567
        %569 = vmatprep.mubr.f32.mxu0 %v374
        %570 = vmatmul.mubr.f32.gmra.mrb[0].mxu0 %v373
        %v571 = vpop.f32.mrb[0].mxu0
        %v572 = vadd.f32 0.0, %v571
        %v573 = vpop.f32.mrb[0].mxu0
        %v574 = vadd.f32 0.0, %v573
        %575 = vmatprep.mubr.f32.mxu0 %v376
        %576 = vmatmul.mubr.f32.gmra.mrb[0].mxu0 %v375
        %v577 = vpop.f32.mrb[0].mxu0
        %v578 = vadd.f32 0.0, %v577
        %v579 = vpop.f32.mrb[0].mxu0
        %v580 = vadd.f32 0.0, %v579
        %581 = vmatprep.mubr.f32.mxu0 %v378
        %582 = vmatmul.mubr.f32.gmra.mrb[0].mxu0 %v377
        %v583 = vpop.f32.mrb[0].mxu0
        %v584 = vadd.f32 0.0, %v583
        %v585 = vpop.f32.mrb[0].mxu0
        %v586 = vadd.f32 0.0, %v585
        %587 = vmatprep.mubr.f32.mxu0 %v380
        %588 = vmatmul.mubr.f32.gmra.mrb[0].mxu0 %v379
        %v589 = vpop.f32.mrb[0].mxu0
        %v590 = vadd.f32 0.0, %v589
        %v591 = vpop.f32.mrb[0].mxu0
        %v592 = vadd.f32 0.0, %v591
        %593 = vmatprep.mubr.f32.mxu0 %v382
        %594 = vmatmul.mubr.f32.gmra.mrb[0].mxu0 %v381
        %v595 = vpop.f32.mrb[0].mxu0
        %v596 = vadd.f32 0.0, %v595
        %v597 = vpop.f32.mrb[0].mxu0
        %v598 = vadd.f32 0.0, %v597
        %599 = vmatprep.mubr.f32.mxu0 %v384
        %600 = vmatmul.mubr.f32.gmra.mrb[0].mxu0 %v383
        %v601 = vpop.f32.mrb[0].mxu0
        %v602 = vadd.f32 0.0, %v601
        %v603 = vpop.f32.mrb[0].mxu0
        %v604 = vadd.f32 0.0, %v603
        %605 = vmatprep.mubr.f32.mxu0 %v386
        %606 = vmatmul.mubr.f32.gmra.mrb[0].mxu0 %v385
        %v607 = vpop.f32.mrb[0].mxu0
        %v608 = vadd.f32 0.0, %v607
        %v609 = vpop.f32.mrb[0].mxu0
        %v610 = vadd.f32 0.0, %v609
        %611 = vmatprep.mubr.f32.mxu0 %v388
        %612 = vmatmul.mubr.f32.gmra.mrb[0].mxu0 %v387
        %v613 = vpop.f32.mrb[0].mxu0
        %v614 = vadd.f32 0.0, %v613
        %v615 = vpop.f32.mrb[0].mxu0
        %v616 = vadd.f32 0.0, %v615
        %617 = vmatprep.mubr.f32.mxu0 %v390
        %618 = vmatmul.mubr.f32.gmra.mrb[0].mxu0 %v389
        %v619 = vpop.f32.mrb[0].mxu0
        %v620 = vadd.f32 0.0, %v619
        %v621 = vpop.f32.mrb[0].mxu0
        %v622 = vadd.f32 0.0, %v621
        %623 = vmatprep.mubr.f32.mxu0 %v392
        %624 = vmatmul.mubr.f32.gmra.mrb[0].mxu0 %v391
        %v625 = vpop.f32.mrb[0].mxu0
        %v626 = vadd.f32 0.0, %v625
        %v627 = vpop.f32.mrb[0].mxu0
        %v628 = vadd.f32 0.0, %v627
        %629 = vmatprep.mubr.f32.mxu0 %v394
        %630 = vmatmul.mubr.f32.gmra.mrb[0].mxu0 %v393
        %v631 = vpop.f32.mrb[0].mxu0
        %v632 = vadd.f32 0.0, %v631
        %v633 = vpop.f32.mrb[0].mxu0
        %v634 = vadd.f32 0.0, %v633
        %635 = vmatprep.mubr.f32.mxu0 %v396
        %636 = vmatmul.mubr.f32.gmra.mrb[0].mxu0 %v395
        %v637 = vpop.f32.mrb[0].mxu0
        %v638 = vadd.f32 0.0, %v637
        %v639 = vpop.f32.mrb[0].mxu0
        %v640 = vadd.f32 0.0, %v639
        %641 = vmatprep.mubr.f32.mxu0 %v398
        %642 = vmatmul.mubr.f32.gmra.mrb[0].mxu0 %v397
        %v643 = vpop.f32.mrb[0].mxu0
        %v644 = vadd.f32 0.0, %v643
        %v645 = vpop.f32.mrb[0].mxu0
        %v646 = vadd.f32 0.0, %v645
        %647 = vmatprep.mubr.f32.mxu0 %v400
        %648 = vmatmul.mubr.f32.gmra.mrb[0].mxu0 %v399
        %v649 = vpop.f32.mrb[0].mxu0
        %v650 = vadd.f32 0.0, %v649
        %v651 = vpop.f32.mrb[0].mxu0
        %v652 = vadd.f32 0.0, %v651
        %653 = vmatprep.mubr.f32.mxu0 %v402
        %654 = vmatmul.mubr.f32.gmra.mrb[0].mxu0 %v401
        %v655 = vpop.f32.mrb[0].mxu0
        %v656 = vadd.f32 0.0, %v655
        %v657 = vpop.f32.mrb[0].mxu0
        %v658 = vadd.f32 0.0, %v657
        %659 = vmatprep.mubr.f32.mxu0 %v404
        %660 = vmatmul.mubr.f32.gmra.mrb[0].mxu0 %v403
        %v661 = vpop.f32.mrb[0].mxu0
        %v662 = vadd.f32 0.0, %v661
        %v663 = vpop.f32.mrb[0].mxu0
        %v664 = vadd.f32 0.0, %v663
        %665 = vmatprep.mubr.f32.mxu0 %v406
        %666 = vmatmul.mubr.f32.gmra.mrb[0].mxu0 %v405
        %v667 = vpop.f32.mrb[0].mxu0
        %v668 = vadd.f32 0.0, %v667
        %v669 = vpop.f32.mrb[0].mxu0
        %v670 = vadd.f32 0.0, %v669
        %671 = vmatprep.mubr.f32.mxu0 %v408
        %672 = vmatmul.mubr.f32.gmra.mrb[0].mxu0 %v407
        %v673 = vpop.f32.mrb[0].mxu0
        %v674 = vadd.f32 0.0, %v673
        %v675 = vpop.f32.mrb[0].mxu0
        %v676 = vadd.f32 0.0, %v675
        %677 = vmatprep.mubr.f32.mxu0 %v410
        %678 = vmatmul.mubr.f32.gmra.mrb[0].mxu0 %v409
        %v679 = vpop.f32.mrb[0].mxu0
        %v680 = vadd.f32 0.0, %v679
        %v681 = vpop.f32.mrb[0].mxu0
        %v682 = vadd.f32 0.0, %v681
        %683 = vmatprep.mubr.f32.mxu0 %v412
        %684 = vmatmul.mubr.f32.gmra.mrb[0].mxu0 %v411
        %v685 = vpop.f32.mrb[0].mxu0
        %v686 = vadd.f32 0.0, %v685
        %v687 = vpop.f32.mrb[0].mxu0
        %v688 = vadd.f32 0.0, %v687
        %689 = vmatprep.mubr.f32.mxu0 %v414
        %690 = vmatmul.mubr.f32.gmra.mrb[0].mxu0 %v413
        %v691 = vpop.f32.mrb[0].mxu0
        %v692 = vadd.f32 0.0, %v691
        %v693 = vpop.f32.mrb[0].mxu0
        %v694 = vadd.f32 0.0, %v693
        %695 = vmatprep.mubr.f32.mxu0 %v416
        %696 = vmatmul.mubr.f32.gmra.mrb[0].mxu0 %v415
        %v697 = vpop.f32.mrb[0].mxu0
        %v698 = vadd.f32 0.0, %v697
        %v699 = vpop.f32.mrb[0].mxu0
        %v700 = vadd.f32 0.0, %v699
        %701 = vmatprep.mubr.f32.mxu0 %v418
        %702 = vmatmul.mubr.f32.gmra.mrb[0].mxu0 %v417
        %v703 = vpop.f32.mrb[0].mxu0
        %v704 = vadd.f32 0.0, %v703
        %v705 = vpop.f32.mrb[0].mxu0
        %v706 = vadd.f32 0.0, %v705
        %707 = vmatprep.mubr.f32.mxu0 %v420
        %708 = vmatmul.mubr.f32.gmra.mrb[0].mxu0 %v419
        %v709 = vpop.f32.mrb[0].mxu0
        %v710 = vadd.f32 0.0, %v709
        %v711 = vpop.f32.mrb[0].mxu0
        %v712 = vadd.f32 0.0, %v711
        %713 = vmatprep.mubr.f32.mxu0 %v422
        %714 = vmatmul.mubr.f32.gmra.mrb[0].mxu0 %v421
        %v715 = vpop.f32.mrb[0].mxu0
        %v716 = vadd.f32 0.0, %v715
        %v717 = vpop.f32.mrb[0].mxu0
        %v718 = vadd.f32 0.0, %v717
        %719 = vmatprep.mubr.f32.mxu0 %v424
        %720 = vmatmul.mubr.f32.gmra.mrb[0].mxu0 %v423
        %v721 = vpop.f32.mrb[0].mxu0
        %v722 = vadd.f32 0.0, %v721
        %v723 = vpop.f32.mrb[0].mxu0
        %v724 = vadd.f32 0.0, %v723
        %725 = vmatprep.mubr.f32.mxu0 %v426
        %726 = vmatmul.mubr.f32.gmra.mrb[0].mxu0 %v425
        %v727 = vpop.f32.mrb[0].mxu0
        %v728 = vadd.f32 0.0, %v727
        %v729 = vpop.f32.mrb[0].mxu0
        %v730 = vadd.f32 0.0, %v729
        %731 = vmatprep.mubr.f32.mxu0 %v428
        %732 = vmatmul.mubr.f32.gmra.mrb[0].mxu0 %v427
        %v733 = vpop.f32.mrb[0].mxu0
        %v734 = vadd.f32 0.0, %v733
        %v735 = vpop.f32.mrb[0].mxu0
        %v736 = vadd.f32 0.0, %v735
        %737 = vmatprep.mubr.f32.mxu0 %v430
        %738 = vmatmul.mubr.f32.gmra.mrb[0].mxu0 %v429
        %v739 = vpop.f32.mrb[0].mxu0
        %v740 = vadd.f32 0.0, %v739
        %v741 = vpop.f32.mrb[0].mxu0
        %v742 = vadd.f32 0.0, %v741
        %743 = vmatprep.mubr.f32.mxu0 %v432
        %744 = vmatmul.mubr.f32.gmra.mrb[0].mxu0 %v431
        %v745 = vpop.f32.mrb[0].mxu0
        %v746 = vadd.f32 0.0, %v745
        %v747 = vpop.f32.mrb[0].mxu0
        %v748 = vadd.f32 0.0, %v747
        %749 = vmatprep.mubr.f32.mxu0 %v434
        %750 = vmatmul.mubr.f32.gmra.mrb[0].mxu0 %v433
        %v751 = vpop.f32.mrb[0].mxu0
        %v752 = vadd.f32 0.0, %v751
        %v753 = vpop.f32.mrb[0].mxu0
        %v754 = vadd.f32 0.0, %v753
        %755 = vdwg.mxu0
        %v756 = vadd.f32 %v307, %v566
        %v757 = vadd.f32 %v308, %v568
        %v758 = vadd.f32 %v309, %v572
        %v759 = vadd.f32 %v310, %v574
        %v760 = vadd.f32 %v311, %v578
        %v761 = vadd.f32 %v312, %v580
        %v762 = vadd.f32 %v313, %v584
        %v763 = vadd.f32 %v314, %v586
        %v764 = vadd.f32 %v315, %v590
        %v765 = vadd.f32 %v316, %v592
        %v766 = vadd.f32 %v317, %v596
        %v767 = vadd.f32 %v318, %v598
        %v768 = vadd.f32 %v319, %v602
        %v769 = vadd.f32 %v320, %v604
        %v770 = vadd.f32 %v321, %v608
        %v771 = vadd.f32 %v322, %v610
        %v772 = vadd.f32 %v323, %v614
        %v773 = vadd.f32 %v324, %v616
        %v774 = vadd.f32 %v325, %v620
        %v775 = vadd.f32 %v326, %v622
        %v776 = vadd.f32 %v327, %v626
        %v777 = vadd.f32 %v328, %v628
        %v778 = vadd.f32 %v329, %v632
        %v779 = vadd.f32 %v330, %v634
        %v780 = vadd.f32 %v331, %v638
        %v781 = vadd.f32 %v332, %v640
        %v782 = vadd.f32 %v333, %v644
        %v783 = vadd.f32 %v334, %v646
        %v784 = vadd.f32 %v335, %v650
        %v785 = vadd.f32 %v336, %v652
        %v786 = vadd.f32 %v337, %v656
        %v787 = vadd.f32 %v338, %v658
        %v788 = vadd.f32 %v339, %v662
        %v789 = vadd.f32 %v340, %v664
        %v790 = vadd.f32 %v341, %v668
        %v791 = vadd.f32 %v342, %v670
        %v792 = vadd.f32 %v343, %v674
        %v793 = vadd.f32 %v344, %v676
        %v794 = vadd.f32 %v345, %v680
        %v795 = vadd.f32 %v346, %v682
        %v796 = vadd.f32 %v347, %v686
        %v797 = vadd.f32 %v348, %v688
        %v798 = vadd.f32 %v349, %v692
        %v799 = vadd.f32 %v350, %v694
        %v800 = vadd.f32 %v351, %v698
        %v801 = vadd.f32 %v352, %v700
        %v802 = vadd.f32 %v353, %v704
        %v803 = vadd.f32 %v354, %v706
        %v804 = vadd.f32 %v355, %v710
        %v805 = vadd.f32 %v356, %v712
        %v806 = vadd.f32 %v357, %v716
        %v807 = vadd.f32 %v358, %v718
        %v808 = vadd.f32 %v359, %v722
        %v809 = vadd.f32 %v360, %v724
        %v810 = vadd.f32 %v361, %v728
        %v811 = vadd.f32 %v362, %v730
        %v812 = vadd.f32 %v363, %v734
        %v813 = vadd.f32 %v364, %v736
        %v814 = vadd.f32 %v365, %v740
        %v815 = vadd.f32 %v366, %v742
        %v816 = vadd.f32 %v367, %v746
        %v817 = vadd.f32 %v368, %v748
        %v818 = vadd.f32 %v369, %v752
        %v819 = vadd.f32 %v370, %v754
        %820 = vst [vmem:[#allocation2] sm:$0xff] %v756
        %821 = vst [vmem:[#allocation2 + $0x8] sm:$0xff] %v757
        %822 = vst [vmem:[#allocation2 + $0x10] sm:$0xff] %v758
        %823 = vst [vmem:[#allocation2 + $0x18] sm:$0xff] %v759
        %824 = vst [vmem:[#allocation2 + $0x20] sm:$0xff] %v760
        %825 = vst [vmem:[#allocation2 + $0x28] sm:$0xff] %v761
        %826 = vst [vmem:[#allocation2 + $0x30] sm:$0xff] %v762
        %827 = vst [vmem:[#allocation2 + $0x38] sm:$0xff] %v763
        %828 = vst [vmem:[#allocation2 + $0x40] sm:$0xff] %v764
        %829 = vst [vmem:[#allocation2 + $0x48] sm:$0xff] %v765
        %830 = vst [vmem:[#allocation2 + $0x50] sm:$0xff] %v766
        %831 = vst [vmem:[#allocation2 + $0x58] sm:$0xff] %v767
        %832 = vst [vmem:[#allocation2 + $0x60] sm:$0xff] %v768
        %833 = vst [vmem:[#allocation2 + $0x68] sm:$0xff] %v769
        %834 = vst [vmem:[#allocation2 + $0x70] sm:$0xff] %v770
        %835 = vst [vmem:[#allocation2 + $0x78] sm:$0xff] %v771
        %836 = vst [vmem:[#allocation2 + $0x80] sm:$0xff] %v772
        %837 = vst [vmem:[#allocation2 + $0x88] sm:$0xff] %v773
        %838 = vst [vmem:[#allocation2 + $0x90] sm:$0xff] %v774
        %839 = vst [vmem:[#allocation2 + $0x98] sm:$0xff] %v775
        %840 = vst [vmem:[#allocation2 + $0xa0] sm:$0xff] %v776
        %841 = vst [vmem:[#allocation2 + $0xa8] sm:$0xff] %v777
        %842 = vst [vmem:[#allocation2 + $0xb0] sm:$0xff] %v778
        %843 = vst [vmem:[#allocation2 + $0xb8] sm:$0xff] %v779
        %844 = vst [vmem:[#allocation2 + $0xc0] sm:$0xff] %v780
        %845 = vst [vmem:[#allocation2 + $0xc8] sm:$0xff] %v781
        %846 = vst [vmem:[#allocation2 + $0xd0] sm:$0xff] %v782
        %847 = vst [vmem:[#allocation2 + $0xd8] sm:$0xff] %v783
        %848 = vst [vmem:[#allocation2 + $0xe0] sm:$0xff] %v784
        %849 = vst [vmem:[#allocation2 + $0xe8] sm:$0xff] %v785
        %850 = vst [vmem:[#allocation2 + $0xf0] sm:$0xff] %v786
        %851 = vst [vmem:[#allocation2 + $0xf8] sm:$0xff] %v787
        %852 = vst [vmem:[#allocation2 + $0x100] sm:$0xff] %v788
        %853 = vst [vmem:[#allocation2 + $0x108] sm:$0xff] %v789
        %854 = vst [vmem:[#allocation2 + $0x110] sm:$0xff] %v790
        %855 = vst [vmem:[#allocation2 + $0x118] sm:$0xff] %v791
        %856 = vst [vmem:[#allocation2 + $0x120] sm:$0xff] %v792
        %857 = vst [vmem:[#allocation2 + $0x128] sm:$0xff] %v793
        %858 = vst [vmem:[#allocation2 + $0x130] sm:$0xff] %v794
        %859 = vst [vmem:[#allocation2 + $0x138] sm:$0xff] %v795
        %860 = vst [vmem:[#allocation2 + $0x140] sm:$0xff] %v796
        %861 = vst [vmem:[#allocation2 + $0x148] sm:$0xff] %v797
        %862 = vst [vmem:[#allocation2 + $0x150] sm:$0xff] %v798
        %863 = vst [vmem:[#allocation2 + $0x158] sm:$0xff] %v799
        %864 = vst [vmem:[#allocation2 + $0x160] sm:$0xff] %v800
        %865 = vst [vmem:[#allocation2 + $0x168] sm:$0xff] %v801
        %866 = vst [vmem:[#allocation2 + $0x170] sm:$0xff] %v802
        %867 = vst [vmem:[#allocation2 + $0x178] sm:$0xff] %v803
        %868 = vst [vmem:[#allocation2 + $0x180] sm:$0xff] %v804
        %869 = vst [vmem:[#allocation2 + $0x188] sm:$0xff] %v805
        %870 = vst [vmem:[#allocation2 + $0x190] sm:$0xff] %v806
        %871 = vst [vmem:[#allocation2 + $0x198] sm:$0xff] %v807
        %872 = vst [vmem:[#allocation2 + $0x1a0] sm:$0xff] %v808
        %873 = vst [vmem:[#allocation2 + $0x1a8] sm:$0xff] %v809
        %874 = vst [vmem:[#allocation2 + $0x1b0] sm:$0xff] %v810
        %875 = vst [vmem:[#allocation2 + $0x1b8] sm:$0xff] %v811
        %876 = vst [vmem:[#allocation2 + $0x1c0] sm:$0xff] %v812
        %877 = vst [vmem:[#allocation2 + $0x1c8] sm:$0xff] %v813
        %878 = vst [vmem:[#allocation2 + $0x1d0] sm:$0xff] %v814
        %879 = vst [vmem:[#allocation2 + $0x1d8] sm:$0xff] %v815
        %880 = vst [vmem:[#allocation2 + $0x1e0] sm:$0xff] %v816
        %881 = vst [vmem:[#allocation2 + $0x1e8] sm:$0xff] %v817
        %882 = vst [vmem:[#allocation2 + $0x1f0] sm:$0xff] %v818
        %883 = vst [vmem:[#allocation2 + $0x1f8] sm:$0xff] %v819
        // Predicated region
        $region41: #{tpu_custom_call.1} parent=27 // pred_check
          %p884 = pneg %p239
        $region42: #{tpu_custom_call.1} parent=27 // pred_check_branch
          %886 = sbr.rel (%p884) target = $region44
        $region43: #{tpu_custom_call.1} parent=27 // pred_region
          %v887 = vld [vmem:[#allocation2] sm:$0xff]
          %v888 = vld [vmem:[#allocation2 + $0x8] sm:$0xff]
          %v889 = vld [vmem:[#allocation2 + $0x10] sm:$0xff]
          %v890 = vld [vmem:[#allocation2 + $0x18] sm:$0xff]
          %v891 = vld [vmem:[#allocation2 + $0x20] sm:$0xff]
          %v892 = vld [vmem:[#allocation2 + $0x28] sm:$0xff]
          %v893 = vld [vmem:[#allocation2 + $0x30] sm:$0xff]
          %v894 = vld [vmem:[#allocation2 + $0x38] sm:$0xff]
          %v895 = vld [vmem:[#allocation2 + $0x40] sm:$0xff]
          %v896 = vld [vmem:[#allocation2 + $0x48] sm:$0xff]
          %v897 = vld [vmem:[#allocation2 + $0x50] sm:$0xff]
          %v898 = vld [vmem:[#allocation2 + $0x58] sm:$0xff]
          %v899 = vld [vmem:[#allocation2 + $0x60] sm:$0xff]
          %v900 = vld [vmem:[#allocation2 + $0x68] sm:$0xff]
          %v901 = vld [vmem:[#allocation2 + $0x70] sm:$0xff]
          %v902 = vld [vmem:[#allocation2 + $0x78] sm:$0xff]
          %v903 = vld [vmem:[#allocation2 + $0x80] sm:$0xff]
          %v904 = vld [vmem:[#allocation2 + $0x88] sm:$0xff]
          %v905 = vld [vmem:[#allocation2 + $0x90] sm:$0xff]
          %v906 = vld [vmem:[#allocation2 + $0x98] sm:$0xff]
          %v907 = vld [vmem:[#allocation2 + $0xa0] sm:$0xff]
          %v908 = vld [vmem:[#allocation2 + $0xa8] sm:$0xff]
          %v909 = vld [vmem:[#allocation2 + $0xb0] sm:$0xff]
          %v910 = vld [vmem:[#allocation2 + $0xb8] sm:$0xff]
          %v911 = vld [vmem:[#allocation2 + $0xc0] sm:$0xff]
          %v912 = vld [vmem:[#allocation2 + $0xc8] sm:$0xff]
          %v913 = vld [vmem:[#allocation2 + $0xd0] sm:$0xff]
          %v914 = vld [vmem:[#allocation2 + $0xd8] sm:$0xff]
          %v915 = vld [vmem:[#allocation2 + $0xe0] sm:$0xff]
          %v916 = vld [vmem:[#allocation2 + $0xe8] sm:$0xff]
          %v917 = vld [vmem:[#allocation2 + $0xf0] sm:$0xff]
          %v918 = vld [vmem:[#allocation2 + $0xf8] sm:$0xff]
          %v919 = vld [vmem:[#allocation2 + $0x100] sm:$0xff]
          %v920 = vld [vmem:[#allocation2 + $0x108] sm:$0xff]
          %v921 = vld [vmem:[#allocation2 + $0x110] sm:$0xff]
          %v922 = vld [vmem:[#allocation2 + $0x118] sm:$0xff]
          %v923 = vld [vmem:[#allocation2 + $0x120] sm:$0xff]
          %v924 = vld [vmem:[#allocation2 + $0x128] sm:$0xff]
          %v925 = vld [vmem:[#allocation2 + $0x130] sm:$0xff]
          %v926 = vld [vmem:[#allocation2 + $0x138] sm:$0xff]
          %v927 = vld [vmem:[#allocation2 + $0x140] sm:$0xff]
          %v928 = vld [vmem:[#allocation2 + $0x148] sm:$0xff]
          %v929 = vld [vmem:[#allocation2 + $0x150] sm:$0xff]
          %v930 = vld [vmem:[#allocation2 + $0x158] sm:$0xff]
          %v931 = vld [vmem:[#allocation2 + $0x160] sm:$0xff]
          %v932 = vld [vmem:[#allocation2 + $0x168] sm:$0xff]
          %v933 = vld [vmem:[#allocation2 + $0x170] sm:$0xff]
          %v934 = vld [vmem:[#allocation2 + $0x178] sm:$0xff]
          %v935 = vld [vmem:[#allocation2 + $0x180] sm:$0xff]
          %v936 = vld [vmem:[#allocation2 + $0x188] sm:$0xff]
          %v937 = vld [vmem:[#allocation2 + $0x190] sm:$0xff]
          %v938 = vld [vmem:[#allocation2 + $0x198] sm:$0xff]
          %v939 = vld [vmem:[#allocation2 + $0x1a0] sm:$0xff]
          %v940 = vld [vmem:[#allocation2 + $0x1a8] sm:$0xff]
          %v941 = vld [vmem:[#allocation2 + $0x1b0] sm:$0xff]
          %v942 = vld [vmem:[#allocation2 + $0x1b8] sm:$0xff]
          %v943 = vld [vmem:[#allocation2 + $0x1c0] sm:$0xff]
          %v944 = vld [vmem:[#allocation2 + $0x1c8] sm:$0xff]
          %v945 = vld [vmem:[#allocation2 + $0x1d0] sm:$0xff]
          %v946 = vld [vmem:[#allocation2 + $0x1d8] sm:$0xff]
          %v947 = vld [vmem:[#allocation2 + $0x1e0] sm:$0xff]
          %v948 = vld [vmem:[#allocation2 + $0x1e8] sm:$0xff]
          %v949 = vld [vmem:[#allocation2 + $0x1f0] sm:$0xff]
          %v950 = vld [vmem:[#allocation2 + $0x1f8] sm:$0xff]
          %951 = vst [vmem:[%s232] sm:$0xff] %v887
          %952 = vst [vmem:[%s232 + $0x8] sm:$0xff] %v888
          %953 = vst [vmem:[%s232 + $0x10] sm:$0xff] %v889
          %954 = vst [vmem:[%s232 + $0x18] sm:$0xff] %v890
          %955 = vst [vmem:[%s232 + $0x20] sm:$0xff] %v891
          %956 = vst [vmem:[%s232 + $0x28] sm:$0xff] %v892
          %957 = vst [vmem:[%s232 + $0x30] sm:$0xff] %v893
          %958 = vst [vmem:[%s232 + $0x38] sm:$0xff] %v894
          %959 = vst [vmem:[%s232 + $0x40] sm:$0xff] %v895
          %960 = vst [vmem:[%s232 + $0x48] sm:$0xff] %v896
          %961 = vst [vmem:[%s232 + $0x50] sm:$0xff] %v897
          %962 = vst [vmem:[%s232 + $0x58] sm:$0xff] %v898
          %963 = vst [vmem:[%s232 + $0x60] sm:$0xff] %v899
          %964 = vst [vmem:[%s232 + $0x68] sm:$0xff] %v900
          %965 = vst [vmem:[%s232 + $0x70] sm:$0xff] %v901
          %966 = vst [vmem:[%s232 + $0x78] sm:$0xff] %v902
          %967 = vst [vmem:[%s232 + $0x80] sm:$0xff] %v903
          %968 = vst [vmem:[%s232 + $0x88] sm:$0xff] %v904
          %969 = vst [vmem:[%s232 + $0x90] sm:$0xff] %v905
          %970 = vst [vmem:[%s232 + $0x98] sm:$0xff] %v906
          %971 = vst [vmem:[%s232 + $0xa0] sm:$0xff] %v907
          %972 = vst [vmem:[%s232 + $0xa8] sm:$0xff] %v908
          %973 = vst [vmem:[%s232 + $0xb0] sm:$0xff] %v909
          %974 = vst [vmem:[%s232 + $0xb8] sm:$0xff] %v910
          %975 = vst [vmem:[%s232 + $0xc0] sm:$0xff] %v911
          %976 = vst [vmem:[%s232 + $0xc8] sm:$0xff] %v912
          %977 = vst [vmem:[%s232 + $0xd0] sm:$0xff] %v913
          %978 = vst [vmem:[%s232 + $0xd8] sm:$0xff] %v914
          %979 = vst [vmem:[%s232 + $0xe0] sm:$0xff] %v915
          %980 = vst [vmem:[%s232 + $0xe8] sm:$0xff] %v916
          %981 = vst [vmem:[%s232 + $0xf0] sm:$0xff] %v917
          %982 = vst [vmem:[%s232 + $0xf8] sm:$0xff] %v918
          %983 = vst [vmem:[%s232 + $0x100] sm:$0xff] %v919
          %984 = vst [vmem:[%s232 + $0x108] sm:$0xff] %v920
          %985 = vst [vmem:[%s232 + $0x110] sm:$0xff] %v921
          %986 = vst [vmem:[%s232 + $0x118] sm:$0xff] %v922
          %987 = vst [vmem:[%s232 + $0x120] sm:$0xff] %v923
          %988 = vst [vmem:[%s232 + $0x128] sm:$0xff] %v924
          %989 = vst [vmem:[%s232 + $0x130] sm:$0xff] %v925
          %990 = vst [vmem:[%s232 + $0x138] sm:$0xff] %v926
          %991 = vst [vmem:[%s232 + $0x140] sm:$0xff] %v927
          %992 = vst [vmem:[%s232 + $0x148] sm:$0xff] %v928
          %993 = vst [vmem:[%s232 + $0x150] sm:$0xff] %v929
          %994 = vst [vmem:[%s232 + $0x158] sm:$0xff] %v930
          %995 = vst [vmem:[%s232 + $0x160] sm:$0xff] %v931
          %996 = vst [vmem:[%s232 + $0x168] sm:$0xff] %v932
          %997 = vst [vmem:[%s232 + $0x170] sm:$0xff] %v933
          %998 = vst [vmem:[%s232 + $0x178] sm:$0xff] %v934
          %999 = vst [vmem:[%s232 + $0x180] sm:$0xff] %v935
          %1000 = vst [vmem:[%s232 + $0x188] sm:$0xff] %v936
          %1001 = vst [vmem:[%s232 + $0x190] sm:$0xff] %v937
          %1002 = vst [vmem:[%s232 + $0x198] sm:$0xff] %v938
          %1003 = vst [vmem:[%s232 + $0x1a0] sm:$0xff] %v939
          %1004 = vst [vmem:[%s232 + $0x1a8] sm:$0xff] %v940
          %1005 = vst [vmem:[%s232 + $0x1b0] sm:$0xff] %v941
          %1006 = vst [vmem:[%s232 + $0x1b8] sm:$0xff] %v942
          %1007 = vst [vmem:[%s232 + $0x1c0] sm:$0xff] %v943
          %1008 = vst [vmem:[%s232 + $0x1c8] sm:$0xff] %v944
          %1009 = vst [vmem:[%s232 + $0x1d0] sm:$0xff] %v945
          %1010 = vst [vmem:[%s232 + $0x1d8] sm:$0xff] %v946
          %1011 = vst [vmem:[%s232 + $0x1e0] sm:$0xff] %v947
          %1012 = vst [vmem:[%s232 + $0x1e8] sm:$0xff] %v948
          %1013 = vst [vmem:[%s232 + $0x1f0] sm:$0xff] %v949
          %1014 = vst [vmem:[%s232 + $0x1f8] sm:$0xff] %v950
        $region44: #{tpu_custom_call.1} parent=27 // pred_fallthru
          _
        %s1015 = sand.u32 %s107, 1
        %s1016 = scalar_lea.sflag [#allocation5], %s1015
        %s1017 = sand.u32 %s107, 1
        %s1018 = smul.addr %s1017, 512
        %s1019 = scalar_lea.vmem [#allocation8], %s1018
        // Predicated region
        $region45: #{tpu_custom_call.1} parent=27 // pred_check
          %p1020 = pneg %p117
        $region46: #{tpu_custom_call.1} parent=27 // pred_check_branch
          %1022 = sbr.rel (%p1020) target = $region48
        $region47: #{tpu_custom_call.1} parent=27 // pred_region
          %s1023 = smul.u32 32, %s27
          %s1024 = smul.u32 2, %s28
          %s1026 = ssub.s32 8192, 8192
          %1027 = vsyncadd %s1016, %s1026
          %s1028 = smul.addr %s1023, 4
          %s1029 = sadd.s32 %s1024, %s1028
          %s1030 = smul.addr %s1029, 128
          %s1031 = scalar_lea.hbm %s2, %s1030
          %s1032 = sshll.u32 %s1019, 4
          %s1033 = int_to_ptr.vmem [resolvable:$true] %s1032
          %1038 = dma.vmem_to_hbm [thread:$0]  %s1033, 8192, %s1031, %s1016, 256, 512, 16
        $region48: #{tpu_custom_call.1} parent=27 // pred_fallthru
          _
      $region28: #{tpu_custom_call.1} parent=5 // pred_fallthru
        _
      %p1039 = scmp.le.s32.totalorder 2, %s17
      // Predicated region
      $region49: #{tpu_custom_call.1} parent=5 // pred_check
        %p1040 = pneg %p1039
      $region50: #{tpu_custom_call.1} parent=5 // pred_check_branch
        %1042 = sbr.rel (%p1040) target = $region52
      $region51: #{tpu_custom_call.1} parent=5 // pred_region
        %s1043 = ssub.s32 %s17, 2
        // Predicated region
        $region53: #{tpu_custom_call.1} parent=51 // pred_check
          %p1044 = pneg %p123
        $region54: #{tpu_custom_call.1} parent=51 // pred_check_branch
          %1046 = sbr.rel (%p1044) target = $region56
        $region55: #{tpu_custom_call.1} parent=51 // pred_region
          %s1047 = sand.u32 %s108, 1
          %s1048 = scalar_lea.sflag [#allocation5], %s1047
          %s1049 = sand.u32 %s108, 1
          %s1050 = smul.addr %s1049, 512
          %s1051 = scalar_lea.vmem [#allocation8], %s1050
          %1052 = dma.done %s1048, 8192
        $region56: #{tpu_custom_call.1} parent=51 // pred_fallthru
          _
      $region52: #{tpu_custom_call.1} parent=5 // pred_fallthru
        _
    $region6: #{tpu_custom_call.1} parent=1 // loop_footer
      %s21 = sadd.s32 1, %s17
    $region7: #{tpu_custom_call.1} parent=1 // loop_footer_branch
      %16 = sbr.rel target = $region3
    $region8: #{tpu_custom_call.1} parent=1 // loop_exit
      _
    %1053 = vsyncpa [#allocation4], 1
    %s1054 = scalar_lea.sflag [#allocation4], 1
    %1055 = vsyncpa %s1054, 1
    %1056 = vsyncpa [#allocation7], 1
    %s1057 = scalar_lea.sflag [#allocation7], 1
    %1058 = vsyncpa %s1057, 1
    %1059 = vsyncpa [#allocation5], 1
    %s1060 = scalar_lea.sflag [#allocation5], 1
    %1061 = vsyncpa %s1060, 1

</llo_original>
